<compile_context>
chip_gen: v7x
topology: tpu7x:2x2x1
jax: 0.10.0
libtpu: 0.0.40
codegen_flags: <defaults>
</compile_context>

<pallas_src>
import functools

import jax
import jax.numpy as jnp
from jax.experimental import pallas as pl
from jax.experimental.pallas import tpu as pltpu

H_IN = 768    # wav2vec2-base hidden size (Linear(768, 128))
H_MID = 128   # head hidden size          (Linear(128, 1))


def _round_up(x, m):
    return (x + m - 1) // m * m


def mos_head_kernel(x_ref, w1_ref, b1_ref, w2_ref, b2_ref, o_ref, acc_ref, *,
                    t_true, need_mask):
    # x_ref  : (GB, TT, 768) bf16   activation tile (GB batch rows, TT steps)
    # w1_ref : (768, 128) bf16      first Linear weight
    # b1_ref : (1, 128) f32         first Linear bias
    # w2_ref : (1, 128) f32         second Linear weight (row vector)
    # b2_ref : (1, 1) f32 (SMEM)    second Linear bias
    # o_ref  : (GB, 1, 1) f32       per-utterance head output
    # acc_ref: (GB, 128) f32        running sum_t ReLU(x @ W1 + b1)
    gb, tt, h_in = x_ref.shape
    t = pl.program_id(1)
    nt = pl.num_programs(1)

    @pl.when(t == 0)
    def _init():
        acc_ref[...] = jnp.zeros_like(acc_ref)

    # One well-shaped MXU matmul: batch folded into M -> M = GB*TT rows.
    x = x_ref[...].reshape(gb * tt, h_in)                             # bf16
    h = jnp.dot(x, w1_ref[...], preferred_element_type=jnp.float32)   # [GB*TT,128]
    h = jnp.maximum(h + b1_ref[...], 0.0)  # ReLU; Dropout(0.1) is identity in eval

    if need_mask:
        # Mask padded timesteps of the (partial) last sequence tile.
        seq = jax.lax.broadcasted_iota(jnp.int32, (tt, H_MID), 0) + t * tt
        valid = seq < t_true

    # Segmented (per batch row) sum over the sequence tile (XLU; MXU slot free).
    for g in range(gb):
        rows = h[g * tt:(g + 1) * tt, :]
        if need_mask:
            rows = jnp.where(valid, rows, 0.0)
        acc_ref[g:g + 1, :] += jnp.sum(rows, axis=0, keepdims=True)

    @pl.when(t == nt - 1)
    def _finalize():
        # Fused Linear(128,1) + mean over dims [1,2]: dot(sum_t h, w2)/T + b2.
        y = jnp.sum(acc_ref[...] * w2_ref[...], axis=1, keepdims=True)  # [GB,1]
        y = y * (1.0 / float(t_true)) + b2_ref[0, 0]
        o_ref[...] = y.reshape(gb, 1, 1).astype(o_ref.dtype)


def wav2vec2_mos_head(hidden, w1, b1, w2, b2, *, tile_t=512, tile_b=4):
    """hidden: [B, T, 768] -> [B, 1, 1] float32 (MOS head of Wav2Vec2MOS)."""
    B, T, H = hidden.shape
    assert H == H_IN
    tile_t = _round_up(tile_t, 16)            # keep bf16 sublane tiles aligned
    TT = min(tile_t, _round_up(T, 16))
    GB = min(tile_b, B)
    T_pad = _round_up(T, TT)
    B_pad = _round_up(B, GB)

    x = hidden.astype(jnp.bfloat16)           # stream activations as bf16
    if (B_pad, T_pad) != (B, T):
        x = jnp.pad(x, ((0, B_pad - B), (0, T_pad - T), (0, 0)))
    w1_bf = w1.astype(jnp.bfloat16)
    b1_2d = b1.reshape(1, H_MID).astype(jnp.float32)
    w2_row = w2.reshape(1, H_MID).astype(jnp.float32)
    b2_2d = b2.reshape(1, 1).astype(jnp.float32)

    grid = (B_pad // GB, T_pad // TT)
    kernel = functools.partial(mos_head_kernel, t_true=T,
                               need_mask=(T_pad != T))

    out = pl.pallas_call(
        kernel,
        out_shape=jax.ShapeDtypeStruct((B_pad, 1, 1), jnp.float32),
        grid_spec=pltpu.PrefetchScalarGridSpec(
            num_scalar_prefetch=0,
            grid=grid,
            in_specs=[
                pl.BlockSpec((GB, TT, H_IN), lambda b, t: (b, t, 0)),
                pl.BlockSpec((H_IN, H_MID), lambda b, t: (0, 0)),
                pl.BlockSpec((1, H_MID), lambda b, t: (0, 0)),
                pl.BlockSpec((1, H_MID), lambda b, t: (0, 0)),
                pl.BlockSpec(memory_space=pltpu.MemorySpace.SMEM),
            ],
            out_specs=pl.BlockSpec((GB, 1, 1), lambda b, t: (b, 0, 0)),
            scratch_shapes=[pltpu.VMEM((GB, H_MID), jnp.float32)],
        ),
        compiler_params=pltpu.CompilerParams(
            dimension_semantics=("parallel", "arbitrary"),
            vmem_limit_bytes=32 * 1024 * 1024,
        ),
    )(x, w1_bf, b1_2d, w2_row, b2_2d)
    return out[:B]


def reference_head(hidden, w1, b1, w2, b2):
    h = jnp.maximum(hidden @ w1 + b1, 0.0)
    y = h @ w2 + b2                       # [B, T, 1]
    return jnp.mean(y, axis=(1, 2), keepdims=True)


if __name__ == "__main__":
    key = jax.random.PRNGKey(0)
    k_x, k_w1, k_b1, k_w2, k_b2 = jax.random.split(key, 5)

    # Small shapes; hidden sizes fixed by the module (768 -> 128 -> 1).
    B, T = 2, 16
    hidden = jax.random.normal(k_x, (B, T, H_IN), dtype=jnp.float32)
    w1 = jax.random.normal(k_w1, (H_IN, H_MID), dtype=jnp.float32) * 0.02
    b1 = jax.random.normal(k_b1, (H_MID,), dtype=jnp.float32) * 0.02
    w2 = jax.random.normal(k_w2, (H_MID, 1), dtype=jnp.float32) * 0.02
    b2 = jax.random.normal(k_b2, (1,), dtype=jnp.float32) * 0.02

    out = jax.block_until_ready(wav2vec2_mos_head(hidden, w1, b1, w2, b2))
    assert out.shape == (B, 1, 1), out.shape

    hid_bf = hidden.astype(jnp.bfloat16).astype(jnp.float32)
    w1_bf = w1.astype(jnp.bfloat16).astype(jnp.float32)
    ref_bf = reference_head(hid_bf, w1_bf, b1, w2, b2)
    ref_f32 = reference_head(hidden, w1, b1, w2, b2)
    assert jnp.allclose(out, ref_bf, atol=2e-3, rtol=2e-3), (out, ref_bf)
    assert jnp.allclose(out, ref_f32, atol=3e-2, rtol=3e-2), (out, ref_f32)

    # Second config: exercises T tiling with a partial last tile (masking),
    # batch grouping with batch padding, and multi-step accumulation.
    B2, T2 = 3, 40
    hidden2 = jax.random.normal(jax.random.fold_in(key, 1), (B2, T2, H_IN),
                                dtype=jnp.float32)
    out2 = jax.block_until_ready(
        wav2vec2_mos_head(hidden2, w1, b1, w2, b2, tile_t=16, tile_b=2))
    assert out2.shape == (B2, 1, 1), out2.shape
    hid2_bf = hidden2.astype(jnp.bfloat16).astype(jnp.float32)
    ref2_bf = reference_head(hid2_bf, w1_bf, b1, w2, b2)
    assert jnp.allclose(out2, ref2_bf, atol=2e-3, rtol=2e-3), (out2, ref2_bf)

    print("KERNEL_OK")
</pallas_src>

<mosaic_0001>
module attributes {stable_mosaic.version = 11 : i64} {
  func.func @mos_head_kernel(%arg0: i32, %arg1: i32, %arg2: memref<2x16x768xbf16, #tpu.memory_space<vmem>>, %arg3: memref<768x128xbf16, #tpu.memory_space<vmem>>, %arg4: memref<1x128xf32, #tpu.memory_space<vmem>>, %arg5: memref<1x128xf32, #tpu.memory_space<vmem>>, %arg6: memref<1x1xf32, #tpu.memory_space<smem>>, %arg7: memref<2x1x1xf32, #tpu.memory_space<vmem>>, %arg8: memref<2x128xf32, #tpu.memory_space<vmem>>) attributes {dimension_semantics = [#tpu.dimension_semantics<parallel>, #tpu.dimension_semantics<arbitrary>], iteration_bounds = array<i64: 1, 1>, scalar_prefetch = 0 : i64, scratch_operands = 1 : i64, tpu.core_type = #tpu.core_type<tc>, window_params = [{transform_indices = @transform_0, window_bounds = array<i64: 2, 16, 768>}, {pipeline_mode = #tpu.pipeline_mode<synchronous>, transform_indices = @transform_1, window_bounds = array<i64: 768, 128>}, {pipeline_mode = #tpu.pipeline_mode<synchronous>, transform_indices = @transform_2, window_bounds = array<i64: 1, 128>}, {pipeline_mode = #tpu.pipeline_mode<synchronous>, transform_indices = @transform_3, window_bounds = array<i64: 1, 128>}, {transform_indices = @transform_4, window_bounds = array<i64: 1, 1>}, {transform_indices = @transform_5, window_bounds = array<i64: 2, 1, 1>}]} {
    %c0_i32 = arith.constant 0 : i32
    %0 = arith.cmpi eq, %arg1, %c0_i32 : i32
    %1 = arith.extui %0 : i1 to i32
    %c0_i32_0 = arith.constant 0 : i32
    %2 = arith.cmpi ne, %1, %c0_i32_0 : i32
    scf.if %2 {
      %cst_19 = arith.constant 0.000000e+00 : f32
      %27 = vector.broadcast %cst_19 : f32 to vector<2x128xf32>
      %c0_20 = arith.constant 0 : index
      %c0_21 = arith.constant 0 : index
      %28 = vector.load %arg8[%c0_20, %c0_21] : memref<2x128xf32, #tpu.memory_space<vmem>>, vector<2x128xf32>
      tpu.vector_store %arg8[%c0_20, %c0_21], %27 {strides = array<i32>} : memref<2x128xf32, #tpu.memory_space<vmem>>, vector<2x128xf32>,
    } else {
    }
    %c0 = arith.constant 0 : index
    %c0_1 = arith.constant 0 : index
    %c0_2 = arith.constant 0 : index
    %3 = vector.load %arg2[%c0, %c0_1, %c0_2] : memref<2x16x768xbf16, #tpu.memory_space<vmem>>, vector<2x16x768xbf16>
    %4 = vector.shape_cast %3 : vector<2x16x768xbf16> to vector<32x768xbf16>
    %c0_3 = arith.constant 0 : index
    %c0_4 = arith.constant 0 : index
    %5 = vector.load %arg3[%c0_3, %c0_4] : memref<768x128xbf16, #tpu.memory_space<vmem>>, vector<768x128xbf16>
    %cst = arith.constant dense<0.000000e+00> : vector<32x128xf32>
    %6 = tpu.matmul %4, %5, %cst {dimension_numbers = #tpu.dot_dimension_numbers<[1], [0], [0], [1], [0, 0, 1, 1], [], []>} : vector<32x768xbf16>, vector<768x128xbf16>, vector<32x128xf32> -> vector<32x128xf32>
    %c0_5 = arith.constant 0 : index
    %c0_6 = arith.constant 0 : index
    %7 = vector.load %arg4[%c0_5, %c0_6] : memref<1x128xf32, #tpu.memory_space<vmem>>, vector<1x128xf32>
    %8 = vector.broadcast %7 : vector<1x128xf32> to vector<32x128xf32>
    %9 = arith.addf %6, %8 : vector<32x128xf32>
    %cst_7 = arith.constant 0.000000e+00 : f32
    %10 = vector.broadcast %cst_7 : f32 to vector<32x128xf32>
    %11 = arith.maximumf %9, %10 : vector<32x128xf32>
    %12 = vector.extract_strided_slice %11 {offsets = [0, 0], sizes = [16, 128], strides = [1, 1]} : vector<32x128xf32> to vector<16x128xf32>
    %c0_8 = arith.constant 0 : index
    %c0_9 = arith.constant 0 : index
    %13 = vector.load %arg8[%c0_8, %c0_9] : memref<2x128xf32, #tpu.memory_space<vmem>>, vector<1x128xf32>
    %cst_10 = arith.constant dense<0.000000e+00> : vector<128xf32>
    %14 = vector.multi_reduction <add>, %12, %cst_10 [0] : vector<16x128xf32> to vector<128xf32>
    %15 = vector.shape_cast %14 : vector<128xf32> to vector<1x128xf32>
    %16 = arith.addf %13, %15 : vector<1x128xf32>
    %c0_11 = arith.constant 0 : index
    %c0_12 = arith.constant 0 : index
    %17 = vector.load %arg8[%c0_11, %c0_12] : memref<2x128xf32, #tpu.memory_space<vmem>>, vector<1x128xf32>
    tpu.vector_store %arg8[%c0_11, %c0_12], %16 {strides = array<i32>} : memref<2x128xf32, #tpu.memory_space<vmem>>, vector<1x128xf32>,
    %18 = vector.extract_strided_slice %11 {offsets = [16, 0], sizes = [16, 128], strides = [1, 1]} : vector<32x128xf32> to vector<16x128xf32>
    %c1 = arith.constant 1 : index
    %c0_13 = arith.constant 0 : index
    %19 = vector.load %arg8[%c1, %c0_13] : memref<2x128xf32, #tpu.memory_space<vmem>>, vector<1x128xf32>
    %cst_14 = arith.constant dense<0.000000e+00> : vector<128xf32>
    %20 = vector.multi_reduction <add>, %18, %cst_14 [0] : vector<16x128xf32> to vector<128xf32>
    %21 = vector.shape_cast %20 : vector<128xf32> to vector<1x128xf32>
    %22 = arith.addf %19, %21 : vector<1x128xf32>
    %c1_15 = arith.constant 1 : index
    %c0_16 = arith.constant 0 : index
    %23 = vector.load %arg8[%c1_15, %c0_16] : memref<2x128xf32, #tpu.memory_space<vmem>>, vector<1x128xf32>
    tpu.vector_store %arg8[%c1_15, %c0_16], %22 {strides = array<i32>} : memref<2x128xf32, #tpu.memory_space<vmem>>, vector<1x128xf32>,
    %c0_i32_17 = arith.constant 0 : i32
    %24 = arith.cmpi eq, %arg1, %c0_i32_17 : i32
    %25 = arith.extui %24 : i1 to i32
    %c0_i32_18 = arith.constant 0 : i32
    %26 = arith.cmpi ne, %25, %c0_i32_18 : i32
    scf.if %26 {
      %c0_19 = arith.constant 0 : index
      %c0_20 = arith.constant 0 : index
      %27 = vector.load %arg8[%c0_19, %c0_20] : memref<2x128xf32, #tpu.memory_space<vmem>>, vector<2x128xf32>
      %c0_21 = arith.constant 0 : index
      %c0_22 = arith.constant 0 : index
      %28 = vector.load %arg5[%c0_21, %c0_22] : memref<1x128xf32, #tpu.memory_space<vmem>>, vector<1x128xf32>
      %29 = vector.broadcast %28 : vector<1x128xf32> to vector<2x128xf32>
      %30 = arith.mulf %27, %29 : vector<2x128xf32>
      %cst_23 = arith.constant dense<0.000000e+00> : vector<2xf32>
      %31 = vector.multi_reduction <add>, %30, %cst_23 [1] : vector<2x128xf32> to vector<2xf32>
      %32 = vector.shape_cast %31 : vector<2xf32> to vector<2x1xf32>
      %cst_24 = arith.constant 6.250000e-02 : f32
      %33 = vector.broadcast %cst_24 : f32 to vector<2x1xf32>
      %34 = arith.mulf %32, %33 : vector<2x1xf32>
      %c0_25 = arith.constant 0 : index
      %c0_26 = arith.constant 0 : index
      %35 = memref.load %arg6[%c0_25, %c0_26] : memref<1x1xf32, #tpu.memory_space<smem>>
      %36 = vector.broadcast %35 : f32 to vector<2x1xf32>
      %37 = arith.addf %34, %36 : vector<2x1xf32>
      %38 = vector.shape_cast %37 : vector<2x1xf32> to vector<2x1x1xf32>
      %c0_27 = arith.constant 0 : index
      %c0_28 = arith.constant 0 : index
      %c0_29 = arith.constant 0 : index
      %39 = vector.load %arg7[%c0_27, %c0_28, %c0_29] : memref<2x1x1xf32, #tpu.memory_space<vmem>>, vector<2x1x1xf32>
      tpu.vector_store %arg7[%c0_27, %c0_28, %c0_29], %38 {strides = array<i32>} : memref<2x1x1xf32, #tpu.memory_space<vmem>>, vector<2x1x1xf32>,
    } else {
    }
    return
  }
  func.func @transform_0(%arg0: i32, %arg1: i32) -> (i32, i32, i32) {
    %c0_i32 = arith.constant 0 : i32
    %c0_i32_0 = arith.constant 0 : i32
    return %arg0, %arg1, %c0_i32 : i32, i32, i32
  }
  func.func @transform_1(%arg0: i32, %arg1: i32) -> (i32, i32) {
    %c0_i32 = arith.constant 0 : i32
    %c0_i32_0 = arith.constant 0 : i32
    %c0_i32_1 = arith.constant 0 : i32
    return %c0_i32, %c0_i32_0 : i32, i32
  }
  func.func @transform_2(%arg0: i32, %arg1: i32) -> (i32, i32) {
    %c0_i32 = arith.constant 0 : i32
    %c0_i32_0 = arith.constant 0 : i32
    %c0_i32_1 = arith.constant 0 : i32
    return %c0_i32, %c0_i32_0 : i32, i32
  }
  func.func @transform_3(%arg0: i32, %arg1: i32) -> (i32, i32) {
    %c0_i32 = arith.constant 0 : i32
    %c0_i32_0 = arith.constant 0 : i32
    %c0_i32_1 = arith.constant 0 : i32
    return %c0_i32, %c0_i32_0 : i32, i32
  }
  func.func @transform_4(%arg0: i32, %arg1: i32) -> (i32, i32) {
    %c0_i32 = arith.constant 0 : i32
    %c0_i32_0 = arith.constant 0 : i32
    %c0_i32_1 = arith.constant 0 : i32
    return %c0_i32, %c0_i32_0 : i32, i32
  }
  func.func @transform_5(%arg0: i32, %arg1: i32) -> (i32, i32, i32) {
    %c0_i32 = arith.constant 0 : i32
    %c0_i32_0 = arith.constant 0 : i32
    %c0_i32_1 = arith.constant 0 : i32
    return %arg0, %c0_i32, %c0_i32_0 : i32, i32, i32
  }
}

</mosaic_0001>

<llo_original>
// kernel: tpu_custom_call.1
$region0: #{tpu_custom_call.1}
  #allocation0 [shape = 'u32[]', space=smem, size = 0x4, offset = 0x4, fixed_abs, tag = 'smem constant byte address 0x4 - core index']
  #allocation1 [shape = 'u32[144,128]{1,0:T(1,128)}', space=vmem, size = 0x12000, scoped, tag = 'internal scratch']
  #allocation2 [shape = 'f32[2,128]{1,0:T(2,128)}', space=vmem, size = 0x400, scoped, tag = 'scratch operand']
  #allocation3 [shape = 'f32[1,1]{1,0:T(1,128)S(6)}', space=smem, size = 0x200, scoped, tag = 'scoped memory for tpu_custom_call.1']
  %s0 = inlined_call_operand.hbm [shape: bf16[2,16,768], index: 0, kind: input, shape index: {}]
  %s1 = inlined_call_operand.hbm [shape: bf16[768,128], index: 1, kind: input, shape index: {}]
  %s2 = inlined_call_operand.vmem [shape: f32[1,128], index: 2, kind: input, shape index: {}]
  %s3 = inlined_call_operand.vmem [shape: f32[1,128], index: 3, kind: input, shape index: {}]
  %s4 = inlined_call_operand.<no memory space> [shape: f32[1,1], index: 4, kind: input, shape index: {}]
  %s5 = inlined_call_operand.vmem [shape: f32[2,1,1], index: 5, kind: output, shape index: {}]
  %s6 = sld [smem:[#allocation0]]
  $region46: #{tpu_custom_call.1} parent=0
    _
  %s8 = ssub.s32 1, %s6
  %s9 = scalar_select 0, %s8, %s6
  %10 = sst [smem:[#allocation3]] %s4
  $region1: #{tpu_custom_call.1} parent=0
    #allocation4 [shape = 'u8[49152]{0}', space=vmem, size = 0xc000, scoped, tag = 'input window, operand 0, single buffered']
    #allocation5 [shape = 's32[1]{0}', space=sflag, size = 0x4, scoped, tag = 'scoped memory for tpu_custom_call.1']
    #allocation6 [shape = 'u8[196608]{0}', space=vmem, size = 0x30000, scoped, tag = 'input window, operand 1, single buffered']
    #allocation7 [shape = 's32[1]{0}', space=sflag, size = 0x4, scoped, tag = 'scoped memory for tpu_custom_call.1']
    %11 = vsyncpa [#allocation5], 0
    %12 = vsyncpa [#allocation7], 0
    // Predicated region
    $region2: #{tpu_custom_call.1} parent=1 // pred_check
      _
    $region3: #{tpu_custom_call.1} parent=1 // pred_check_branch
      %14 = sbr.rel (0) target = $region5
    $region4: #{tpu_custom_call.1} parent=1 // pred_region
      %s16 = ssub.s32 1536, 1536
      %17 = vsyncadd [#allocation5], %s16
      %s18 = sshll.u32 [#allocation4], 4
      %s19 = int_to_ptr.vmem [resolvable:$true] %s18
      %24 = dma.hbm_to_vmem [thread:$0]  %s0, 1536, %s19, [#allocation5], 384, 384, 24
    $region5: #{tpu_custom_call.1} parent=1 // pred_fallthru
      _
    // Predicated region
    $region6: #{tpu_custom_call.1} parent=1 // pred_check
      _
    $region7: #{tpu_custom_call.1} parent=1 // pred_check_branch
      %26 = sbr.rel (0) target = $region9
    $region8: #{tpu_custom_call.1} parent=1 // pred_region
      %s28 = ssub.s32 6144, 6144
      %29 = vsyncadd [#allocation7], %s28
      %s30 = sshll.u32 [#allocation6], 4
      %s31 = int_to_ptr.vmem [resolvable:$true] %s30
      %36 = dma.hbm_to_vmem [thread:$0]  %s1, 6144, %s31, [#allocation7], 64, 64, 4
    $region9: #{tpu_custom_call.1} parent=1 // pred_fallthru
      _
    // Predicated region
    $region10: #{tpu_custom_call.1} parent=1 // pred_check
      _
    $region11: #{tpu_custom_call.1} parent=1 // pred_check_branch
      %38 = sbr.rel (0) target = $region13
    $region12: #{tpu_custom_call.1} parent=1 // pred_region
      _
    $region13: #{tpu_custom_call.1} parent=1 // pred_fallthru
      _
    // Predicated region
    $region14: #{tpu_custom_call.1} parent=1 // pred_check
      _
    $region15: #{tpu_custom_call.1} parent=1 // pred_check_branch
      %40 = sbr.rel (0) target = $region17
    $region16: #{tpu_custom_call.1} parent=1 // pred_region
      _
    $region17: #{tpu_custom_call.1} parent=1 // pred_fallthru
      _
    // Predicated region
    $region18: #{tpu_custom_call.1} parent=1 // pred_check
      _
    $region19: #{tpu_custom_call.1} parent=1 // pred_check_branch
      %42 = sbr.rel (0) target = $region21
    $region20: #{tpu_custom_call.1} parent=1 // pred_region
      _
    $region21: #{tpu_custom_call.1} parent=1 // pred_fallthru
      _
    // Predicated region
    $region22: #{tpu_custom_call.1} parent=1 // pred_check
      _
    $region23: #{tpu_custom_call.1} parent=1 // pred_check_branch
      %44 = sbr.rel (0) target = $region25
    $region24: #{tpu_custom_call.1} parent=1 // pred_region
      %45 = dma.done [#allocation5], 1536
    $region25: #{tpu_custom_call.1} parent=1 // pred_fallthru
      _
    // Predicated region
    $region26: #{tpu_custom_call.1} parent=1 // pred_check
      _
    $region27: #{tpu_custom_call.1} parent=1 // pred_check_branch
      %47 = sbr.rel (0) target = $region29
    $region28: #{tpu_custom_call.1} parent=1 // pred_region
      %48 = dma.done [#allocation7], 6144
    $region29: #{tpu_custom_call.1} parent=1 // pred_fallthru
      _
    %p50 = scmp.eq.s32.totalorder 0, 0
    // Predicated region
    $region30: #{tpu_custom_call.1} parent=1 // pred_check
      %p51 = pneg %p50
    $region31: #{tpu_custom_call.1} parent=1 // pred_check_branch
      %53 = sbr.rel (%p51) target = $region33
    $region32: #{tpu_custom_call.1} parent=1 // pred_region
      %54 = vst [vmem:[#allocation2] sm:$0x3] 0.0
    $region33: #{tpu_custom_call.1} parent=1 // pred_fallthru
      _
    %v55 = vld [vmem:[#allocation4] sm:$0xff]
    %v56 = vld [vmem:[#allocation4 + $0x8] sm:$0xff]
    %v57 = vld [vmem:[#allocation4 + $0x10] sm:$0xff]
    %v58 = vld [vmem:[#allocation4 + $0x18] sm:$0xff]
    %v59 = vld [vmem:[#allocation4 + $0x20] sm:$0xff]
    %v60 = vld [vmem:[#allocation4 + $0x28] sm:$0xff]
    %v61 = vld [vmem:[#allocation4 + $0x30] sm:$0xff]
    %v62 = vld [vmem:[#allocation4 + $0x38] sm:$0xff]
    %v63 = vld [vmem:[#allocation4 + $0x40] sm:$0xff]
    %v64 = vld [vmem:[#allocation4 + $0x48] sm:$0xff]
    %v65 = vld [vmem:[#allocation4 + $0x50] sm:$0xff]
    %v66 = vld [vmem:[#allocation4 + $0x58] sm:$0xff]
    %v67 = vld [vmem:[#allocation6] sm:$0xf]
    %v68 = vld [vmem:[#allocation6 + $0x4] sm:$0xf]
    %v69 = vld [vmem:[#allocation6 + $0x8] sm:$0xf]
    %v70 = vld [vmem:[#allocation6 + $0xc] sm:$0xf]
    %v71 = vld [vmem:[#allocation6 + $0x10] sm:$0xf]
    %v72 = vld [vmem:[#allocation6 + $0x14] sm:$0xf]
    %v73 = vld [vmem:[#allocation6 + $0x18] sm:$0xf]
    %v74 = vld [vmem:[#allocation6 + $0x1c] sm:$0xf]
    %v75 = vld [vmem:[#allocation6 + $0x20] sm:$0xf]
    %v76 = vld [vmem:[#allocation6 + $0x24] sm:$0xf]
    %v77 = vld [vmem:[#allocation6 + $0x28] sm:$0xf]
    %v78 = vld [vmem:[#allocation6 + $0x2c] sm:$0xf]
    %v79 = vld [vmem:[#allocation6 + $0x30] sm:$0xf]
    %v80 = vld [vmem:[#allocation6 + $0x34] sm:$0xf]
    %v81 = vld [vmem:[#allocation6 + $0x38] sm:$0xf]
    %v82 = vld [vmem:[#allocation6 + $0x3c] sm:$0xf]
    %v83 = vld [vmem:[#allocation6 + $0x40] sm:$0xf]
    %v84 = vld [vmem:[#allocation6 + $0x44] sm:$0xf]
    %v85 = vld [vmem:[#allocation6 + $0x48] sm:$0xf]
    %v86 = vld [vmem:[#allocation6 + $0x4c] sm:$0xf]
    %v87 = vld [vmem:[#allocation6 + $0x50] sm:$0xf]
    %v88 = vld [vmem:[#allocation6 + $0x54] sm:$0xf]
    %v89 = vld [vmem:[#allocation6 + $0x58] sm:$0xf]
    %v90 = vld [vmem:[#allocation6 + $0x5c] sm:$0xf]
    %v91 = vld [vmem:[#allocation6 + $0x60] sm:$0xf]
    %v92 = vld [vmem:[#allocation6 + $0x64] sm:$0xf]
    %v93 = vld [vmem:[#allocation6 + $0x68] sm:$0xf]
    %v94 = vld [vmem:[#allocation6 + $0x6c] sm:$0xf]
    %v95 = vld [vmem:[#allocation6 + $0x70] sm:$0xf]
    %v96 = vld [vmem:[#allocation6 + $0x74] sm:$0xf]
    %v97 = vld [vmem:[#allocation6 + $0x78] sm:$0xf]
    %v98 = vld [vmem:[#allocation6 + $0x7c] sm:$0xf]
    %v99 = vld [vmem:[#allocation6 + $0x80] sm:$0xf]
    %v100 = vld [vmem:[#allocation6 + $0x84] sm:$0xf]
    %v101 = vld [vmem:[#allocation6 + $0x88] sm:$0xf]
    %v102 = vld [vmem:[#allocation6 + $0x8c] sm:$0xf]
    %v103 = vld [vmem:[#allocation6 + $0x90] sm:$0xf]
    %v104 = vld [vmem:[#allocation6 + $0x94] sm:$0xf]
    %v105 = vld [vmem:[#allocation6 + $0x98] sm:$0xf]
    %v106 = vld [vmem:[#allocation6 + $0x9c] sm:$0xf]
    %v107 = vld [vmem:[#allocation6 + $0xa0] sm:$0xf]
    %v108 = vld [vmem:[#allocation6 + $0xa4] sm:$0xf]
    %v109 = vld [vmem:[#allocation6 + $0xa8] sm:$0xf]
    %v110 = vld [vmem:[#allocation6 + $0xac] sm:$0xf]
    %v111 = vld [vmem:[#allocation6 + $0xb0] sm:$0xf]
    %v112 = vld [vmem:[#allocation6 + $0xb4] sm:$0xf]
    %v113 = vld [vmem:[#allocation6 + $0xb8] sm:$0xf]
    %v114 = vld [vmem:[#allocation6 + $0xbc] sm:$0xf]
    %v115 = vld [vmem:[#allocation6 + $0xc0] sm:$0xf]
    %v116 = vld [vmem:[#allocation6 + $0xc4] sm:$0xf]
    %v117 = vld [vmem:[#allocation6 + $0xc8] sm:$0xf]
    %v118 = vld [vmem:[#allocation6 + $0xcc] sm:$0xf]
    %v119 = vld [vmem:[#allocation6 + $0xd0] sm:$0xf]
    %v120 = vld [vmem:[#allocation6 + $0xd4] sm:$0xf]
    %v121 = vld [vmem:[#allocation6 + $0xd8] sm:$0xf]
    %v122 = vld [vmem:[#allocation6 + $0xdc] sm:$0xf]
    %v123 = vld [vmem:[#allocation6 + $0xe0] sm:$0xf]
    %v124 = vld [vmem:[#allocation6 + $0xe4] sm:$0xf]
    %v125 = vld [vmem:[#allocation6 + $0xe8] sm:$0xf]
    %v126 = vld [vmem:[#allocation6 + $0xec] sm:$0xf]
    %v127 = vld [vmem:[#allocation6 + $0xf0] sm:$0xf]
    %v128 = vld [vmem:[#allocation6 + $0xf4] sm:$0xf]
    %v129 = vld [vmem:[#allocation6 + $0xf8] sm:$0xf]
    %v130 = vld [vmem:[#allocation6 + $0xfc] sm:$0xf]
    %v131 = vld [vmem:[#allocation6 + $0x100] sm:$0xf]
    %v132 = vld [vmem:[#allocation6 + $0x104] sm:$0xf]
    %v133 = vld [vmem:[#allocation6 + $0x108] sm:$0xf]
    %v134 = vld [vmem:[#allocation6 + $0x10c] sm:$0xf]
    %v135 = vld [vmem:[#allocation6 + $0x110] sm:$0xf]
    %v136 = vld [vmem:[#allocation6 + $0x114] sm:$0xf]
    %v137 = vld [vmem:[#allocation6 + $0x118] sm:$0xf]
    %v138 = vld [vmem:[#allocation6 + $0x11c] sm:$0xf]
    %v139 = vld [vmem:[#allocation6 + $0x120] sm:$0xf]
    %v140 = vld [vmem:[#allocation6 + $0x124] sm:$0xf]
    %v141 = vld [vmem:[#allocation6 + $0x128] sm:$0xf]
    %v142 = vld [vmem:[#allocation6 + $0x12c] sm:$0xf]
    %v143 = vld [vmem:[#allocation6 + $0x130] sm:$0xf]
    %v144 = vld [vmem:[#allocation6 + $0x134] sm:$0xf]
    %v145 = vld [vmem:[#allocation6 + $0x138] sm:$0xf]
    %v146 = vld [vmem:[#allocation6 + $0x13c] sm:$0xf]
    %v147 = vld [vmem:[#allocation6 + $0x140] sm:$0xf]
    %v148 = vld [vmem:[#allocation6 + $0x144] sm:$0xf]
    %v149 = vld [vmem:[#allocation6 + $0x148] sm:$0xf]
    %v150 = vld [vmem:[#allocation6 + $0x14c] sm:$0xf]
    %v151 = vld [vmem:[#allocation6 + $0x150] sm:$0xf]
    %v152 = vld [vmem:[#allocation6 + $0x154] sm:$0xf]
    %v153 = vld [vmem:[#allocation6 + $0x158] sm:$0xf]
    %v154 = vld [vmem:[#allocation6 + $0x15c] sm:$0xf]
    %v155 = vld [vmem:[#allocation6 + $0x160] sm:$0xf]
    %v156 = vld [vmem:[#allocation6 + $0x164] sm:$0xf]
    %v157 = vld [vmem:[#allocation6 + $0x168] sm:$0xf]
    %v158 = vld [vmem:[#allocation6 + $0x16c] sm:$0xf]
    %v159 = vld [vmem:[#allocation6 + $0x170] sm:$0xf]
    %v160 = vld [vmem:[#allocation6 + $0x174] sm:$0xf]
    %v161 = vld [vmem:[#allocation6 + $0x178] sm:$0xf]
    %v162 = vld [vmem:[#allocation6 + $0x17c] sm:$0xf]
    %v163 = vld [vmem:[%s2] sm:$0x1]
    %v165 = vlaneseq
    %v166 = vshrl.u32 %v165, 7
    %v167 = vsub.s32 0, %v166
    %v168 = vrot.slane %v163, %v167
    %v182 = vunpack.c.l.b16 %v55
    %v183 = vunpack.c.h.b16 %v55
    %v184 = vunpack.c.l.b16 %v56
    %v185 = vunpack.c.h.b16 %v56
    %v186 = vunpack.c.l.b16 %v57
    %v187 = vunpack.c.h.b16 %v57
    %v188 = vunpack.c.l.b16 %v58
    %v189 = vunpack.c.h.b16 %v58
    %v190 = vunpack.c.l.b16 %v59
    %v191 = vunpack.c.h.b16 %v59
    %v192 = vunpack.c.l.b16 %v60
    %v193 = vunpack.c.h.b16 %v60
    %v194 = vunpack.c.l.b16 %v61
    %v195 = vunpack.c.h.b16 %v61
    %v196 = vunpack.c.l.b16 %v62
    %v197 = vunpack.c.h.b16 %v62
    %v198 = vunpack.c.l.b16 %v63
    %v199 = vunpack.c.h.b16 %v63
    %v200 = vunpack.c.l.b16 %v64
    %v201 = vunpack.c.h.b16 %v64
    %v202 = vunpack.c.l.b16 %v65
    %v203 = vunpack.c.h.b16 %v65
    %v204 = vunpack.c.l.b16 %v66
    %v205 = vunpack.c.h.b16 %v66
    %v206 = vpack.c.b16 %v188, %v182
    %v207 = vpack.c.b16 %v189, %v183
    %v208 = vpack.c.b16 %v190, %v184
    %v209 = vpack.c.b16 %v191, %v185
    %v210 = vpack.c.b16 %v192, %v186
    %v211 = vpack.c.b16 %v193, %v187
    %v212 = vpack.c.b16 %v200, %v194
    %v213 = vpack.c.b16 %v201, %v195
    %v214 = vpack.c.b16 %v202, %v196
    %v215 = vpack.c.b16 %v203, %v197
    %v216 = vpack.c.b16 %v204, %v198
    %v217 = vpack.c.b16 %v205, %v199
    %v326 = vunpack.c.l.b16 %v67
    %v327 = vunpack.c.l.b16 %v68
    %v328 = vunpack.c.l.b16 %v69
    %v329 = vunpack.c.l.b16 %v70
    %v330 = vunpack.c.l.b16 %v71
    %v331 = vunpack.c.l.b16 %v72
    %v332 = vunpack.c.l.b16 %v73
    %v333 = vunpack.c.l.b16 %v74
    %v334 = vunpack.c.l.b16 %v75
    %v335 = vunpack.c.l.b16 %v76
    %v336 = vunpack.c.l.b16 %v77
    %v337 = vunpack.c.l.b16 %v78
    %v338 = vunpack.c.l.b16 %v79
    %v339 = vunpack.c.l.b16 %v80
    %v340 = vunpack.c.l.b16 %v81
    %v341 = vunpack.c.l.b16 %v82
    %v342 = vunpack.c.l.b16 %v83
    %v343 = vunpack.c.l.b16 %v84
    %v344 = vunpack.c.l.b16 %v85
    %v345 = vunpack.c.l.b16 %v86
    %v346 = vunpack.c.l.b16 %v87
    %v347 = vunpack.c.l.b16 %v88
    %v348 = vunpack.c.l.b16 %v89
    %v349 = vunpack.c.l.b16 %v90
    %v350 = vunpack.c.l.b16 %v91
    %v351 = vunpack.c.l.b16 %v92
    %v352 = vunpack.c.l.b16 %v93
    %v353 = vunpack.c.l.b16 %v94
    %v354 = vunpack.c.l.b16 %v95
    %v355 = vunpack.c.l.b16 %v96
    %v356 = vunpack.c.l.b16 %v97
    %v357 = vunpack.c.l.b16 %v98
    %v358 = vunpack.c.l.b16 %v99
    %v359 = vunpack.c.l.b16 %v100
    %v360 = vunpack.c.l.b16 %v101
    %v361 = vunpack.c.l.b16 %v102
    %v362 = vunpack.c.l.b16 %v103
    %v363 = vunpack.c.l.b16 %v104
    %v364 = vunpack.c.l.b16 %v105
    %v365 = vunpack.c.l.b16 %v106
    %v366 = vunpack.c.l.b16 %v107
    %v367 = vunpack.c.l.b16 %v108
    %v368 = vunpack.c.l.b16 %v109
    %v369 = vunpack.c.l.b16 %v110
    %v370 = vunpack.c.l.b16 %v111
    %v371 = vunpack.c.l.b16 %v112
    %v372 = vunpack.c.l.b16 %v113
    %v373 = vunpack.c.l.b16 %v114
    %v374 = vunpack.c.l.b16 %v115
    %v375 = vunpack.c.l.b16 %v116
    %v376 = vunpack.c.l.b16 %v117
    %v377 = vunpack.c.l.b16 %v118
    %v378 = vunpack.c.l.b16 %v119
    %v379 = vunpack.c.l.b16 %v120
    %v380 = vunpack.c.l.b16 %v121
    %v381 = vunpack.c.l.b16 %v122
    %v382 = vunpack.c.l.b16 %v123
    %v383 = vunpack.c.l.b16 %v124
    %v384 = vunpack.c.l.b16 %v125
    %v385 = vunpack.c.l.b16 %v126
    %v386 = vunpack.c.l.b16 %v127
    %v387 = vunpack.c.l.b16 %v128
    %v388 = vunpack.c.l.b16 %v129
    %v389 = vunpack.c.l.b16 %v130
    %v390 = vunpack.c.l.b16 %v131
    %v391 = vunpack.c.l.b16 %v132
    %v392 = vunpack.c.l.b16 %v133
    %v393 = vunpack.c.l.b16 %v134
    %v394 = vunpack.c.l.b16 %v135
    %v395 = vunpack.c.l.b16 %v136
    %v396 = vunpack.c.l.b16 %v137
    %v397 = vunpack.c.l.b16 %v138
    %v398 = vunpack.c.l.b16 %v139
    %v399 = vunpack.c.l.b16 %v140
    %v400 = vunpack.c.l.b16 %v141
    %v401 = vunpack.c.l.b16 %v142
    %v402 = vunpack.c.l.b16 %v143
    %v403 = vunpack.c.l.b16 %v144
    %v404 = vunpack.c.l.b16 %v145
    %v405 = vunpack.c.l.b16 %v146
    %v406 = vunpack.c.l.b16 %v147
    %v407 = vunpack.c.l.b16 %v148
    %v408 = vunpack.c.l.b16 %v149
    %v409 = vunpack.c.l.b16 %v150
    %v410 = vunpack.c.l.b16 %v151
    %v411 = vunpack.c.l.b16 %v152
    %v412 = vunpack.c.l.b16 %v153
    %v413 = vunpack.c.l.b16 %v154
    %v414 = vunpack.c.l.b16 %v155
    %v415 = vunpack.c.l.b16 %v156
    %v416 = vunpack.c.l.b16 %v157
    %v417 = vunpack.c.l.b16 %v158
    %v418 = vunpack.c.l.b16 %v159
    %v419 = vunpack.c.l.b16 %v160
    %v420 = vunpack.c.l.b16 %v161
    %v421 = vunpack.c.l.b16 %v162
    %v422 = vpack.c.b16 %v327, %v326
    %v423 = vpack.c.b16 %v329, %v328
    %v424 = vpack.c.b16 %v331, %v330
    %v425 = vpack.c.b16 %v333, %v332
    %v426 = vpack.c.b16 %v335, %v334
    %v427 = vpack.c.b16 %v337, %v336
    %v428 = vpack.c.b16 %v339, %v338
    %v429 = vpack.c.b16 %v341, %v340
    %v430 = vpack.c.b16 %v343, %v342
    %v431 = vpack.c.b16 %v345, %v344
    %v432 = vpack.c.b16 %v347, %v346
    %v433 = vpack.c.b16 %v349, %v348
    %v434 = vpack.c.b16 %v351, %v350
    %v435 = vpack.c.b16 %v353, %v352
    %v436 = vpack.c.b16 %v355, %v354
    %v437 = vpack.c.b16 %v357, %v356
    %v438 = vpack.c.b16 %v359, %v358
    %v439 = vpack.c.b16 %v361, %v360
    %v440 = vpack.c.b16 %v363, %v362
    %v441 = vpack.c.b16 %v365, %v364
    %v442 = vpack.c.b16 %v367, %v366
    %v443 = vpack.c.b16 %v369, %v368
    %v444 = vpack.c.b16 %v371, %v370
    %v445 = vpack.c.b16 %v373, %v372
    %v446 = vpack.c.b16 %v375, %v374
    %v447 = vpack.c.b16 %v377, %v376
    %v448 = vpack.c.b16 %v379, %v378
    %v449 = vpack.c.b16 %v381, %v380
    %v450 = vpack.c.b16 %v383, %v382
    %v451 = vpack.c.b16 %v385, %v384
    %v452 = vpack.c.b16 %v387, %v386
    %v453 = vpack.c.b16 %v389, %v388
    %v454 = vpack.c.b16 %v391, %v390
    %v455 = vpack.c.b16 %v393, %v392
    %v456 = vpack.c.b16 %v395, %v394
    %v457 = vpack.c.b16 %v397, %v396
    %v458 = vpack.c.b16 %v399, %v398
    %v459 = vpack.c.b16 %v401, %v400
    %v460 = vpack.c.b16 %v403, %v402
    %v461 = vpack.c.b16 %v405, %v404
    %v462 = vpack.c.b16 %v407, %v406
    %v463 = vpack.c.b16 %v409, %v408
    %v464 = vpack.c.b16 %v411, %v410
    %v465 = vpack.c.b16 %v413, %v412
    %v466 = vpack.c.b16 %v415, %v414
    %v467 = vpack.c.b16 %v417, %v416
    %v468 = vpack.c.b16 %v419, %v418
    %v469 = vpack.c.b16 %v421, %v420
    %518 = vmatprep.subr.bf16.mxu0 0
    %519 = vmatpush1.bf16.msra.mxu0 %v422
    %520 = vmatprep.subr.bf16.mxu0 0
    %521 = vmatpush1.bf16.msra.mxu0 %v423
    %522 = vmatprep.subr.bf16.mxu0 0
    %523 = vmatpush1.bf16.msra.mxu0 %v424
    %524 = vmatprep.subr.bf16.mxu0 0
    %525 = vmatpush1.bf16.msra.mxu0 %v425
    %526 = vmatprep.subr.bf16.mxu0 0
    %527 = vmatpush1.bf16.msra.mxu0 %v426
    %528 = vmatprep.subr.bf16.mxu0 0
    %529 = vmatpush1.bf16.msra.mxu0 %v427
    %530 = vmatprep.subr.bf16.mxu0 0
    %531 = vmatpush1.bf16.msra.mxu0 %v428
    %532 = vmatprep.subr.bf16.mxu0 0
    %533 = vmatpush1.bf16.msra.mxu0 %v429
    %534 = vmatprep.subr.bf16.mxu0 0
    %535 = vmatpush1.bf16.msra.mxu0 %v430
    %536 = vmatprep.subr.bf16.mxu0 0
    %537 = vmatpush1.bf16.msra.mxu0 %v431
    %538 = vmatprep.subr.bf16.mxu0 0
    %539 = vmatpush1.bf16.msra.mxu0 %v432
    %540 = vmatprep.subr.bf16.mxu0 0
    %541 = vmatpush1.bf16.msra.mxu0 %v433
    %542 = vmatprep.subr.bf16.mxu0 0
    %543 = vmatpush1.bf16.msra.mxu0 %v434
    %544 = vmatprep.subr.bf16.mxu0 0
    %545 = vmatpush1.bf16.msra.mxu0 %v435
    %546 = vmatprep.subr.bf16.mxu0 0
    %547 = vmatpush1.bf16.msra.mxu0 %v436
    %548 = vmatprep.subr.bf16.mxu0 0
    %549 = vmatpush1.bf16.msra.mxu0 %v437
    %550 = vmatprep.mubr.bf16.mxu0 %v207
    %551 = vmatmul.mubr.bf16.gmra.mrb[0].mxu0 %v206
    %v552 = vpop.f32.mrb[0].mxu0
    %v553 = vadd.f32 %v168, %v552
    %v554 = vpop.f32.mrb[0].mxu0
    %v555 = vpop.f32.mrb[0].mxu0
    %v556 = vadd.f32 %v168, %v555
    %v557 = vpop.f32.mrb[0].mxu0
    %558 = vmatprep.mubr.bf16.mxu0 %v213
    %559 = vmatmul.mubr.bf16.gmra.mrb[0].mxu0 %v212
    %v560 = vpop.f32.mrb[0].mxu0
    %v561 = vadd.f32 %v168, %v560
    %v562 = vpop.f32.mrb[0].mxu0
    %v563 = vpop.f32.mrb[0].mxu0
    %v564 = vadd.f32 %v168, %v563
    %v565 = vpop.f32.mrb[0].mxu0
    %566 = vdwg.mxu0
    %567 = vmatprep.subr.bf16.mxu0 0
    %568 = vmatpush1.bf16.msra.mxu0 %v438
    %569 = vmatprep.subr.bf16.mxu0 0
    %570 = vmatpush1.bf16.msra.mxu0 %v439
    %571 = vmatprep.subr.bf16.mxu0 0
    %572 = vmatpush1.bf16.msra.mxu0 %v440
    %573 = vmatprep.subr.bf16.mxu0 0
    %574 = vmatpush1.bf16.msra.mxu0 %v441
    %575 = vmatprep.subr.bf16.mxu0 0
    %576 = vmatpush1.bf16.msra.mxu0 %v442
    %577 = vmatprep.subr.bf16.mxu0 0
    %578 = vmatpush1.bf16.msra.mxu0 %v443
    %579 = vmatprep.subr.bf16.mxu0 0
    %580 = vmatpush1.bf16.msra.mxu0 %v444
    %581 = vmatprep.subr.bf16.mxu0 0
    %582 = vmatpush1.bf16.msra.mxu0 %v445
    %583 = vmatprep.subr.bf16.mxu0 0
    %584 = vmatpush1.bf16.msra.mxu0 %v446
    %585 = vmatprep.subr.bf16.mxu0 0
    %586 = vmatpush1.bf16.msra.mxu0 %v447
    %587 = vmatprep.subr.bf16.mxu0 0
    %588 = vmatpush1.bf16.msra.mxu0 %v448
    %589 = vmatprep.subr.bf16.mxu0 0
    %590 = vmatpush1.bf16.msra.mxu0 %v449
    %591 = vmatprep.subr.bf16.mxu0 0
    %592 = vmatpush1.bf16.msra.mxu0 %v450
    %593 = vmatprep.subr.bf16.mxu0 0
    %594 = vmatpush1.bf16.msra.mxu0 %v451
    %595 = vmatprep.subr.bf16.mxu0 0
    %596 = vmatpush1.bf16.msra.mxu0 %v452
    %597 = vmatprep.subr.bf16.mxu0 0
    %598 = vmatpush1.bf16.msra.mxu0 %v453
    %599 = vmatprep.mubr.bf16.mxu0 %v209
    %600 = vmatmul.mubr.bf16.gmra.mrb[0].mxu0 %v208
    %v601 = vpop.f32.mrb[0].mxu0
    %v602 = vadd.f32 %v553, %v601
    %v603 = vpop.f32.mrb[0].mxu0
    %v604 = vpop.f32.mrb[0].mxu0
    %v605 = vadd.f32 %v556, %v604
    %v606 = vpop.f32.mrb[0].mxu0
    %607 = vmatprep.mubr.bf16.mxu0 %v215
    %608 = vmatmul.mubr.bf16.gmra.mrb[0].mxu0 %v214
    %v609 = vpop.f32.mrb[0].mxu0
    %v610 = vadd.f32 %v561, %v609
    %v611 = vpop.f32.mrb[0].mxu0
    %v612 = vpop.f32.mrb[0].mxu0
    %v613 = vadd.f32 %v564, %v612
    %v614 = vpop.f32.mrb[0].mxu0
    %615 = vdwg.mxu0
    %616 = vmatprep.subr.bf16.mxu0 0
    %617 = vmatpush1.bf16.msra.mxu0 %v454
    %618 = vmatprep.subr.bf16.mxu0 0
    %619 = vmatpush1.bf16.msra.mxu0 %v455
    %620 = vmatprep.subr.bf16.mxu0 0
    %621 = vmatpush1.bf16.msra.mxu0 %v456
    %622 = vmatprep.subr.bf16.mxu0 0
    %623 = vmatpush1.bf16.msra.mxu0 %v457
    %624 = vmatprep.subr.bf16.mxu0 0
    %625 = vmatpush1.bf16.msra.mxu0 %v458
    %626 = vmatprep.subr.bf16.mxu0 0
    %627 = vmatpush1.bf16.msra.mxu0 %v459
    %628 = vmatprep.subr.bf16.mxu0 0
    %629 = vmatpush1.bf16.msra.mxu0 %v460
    %630 = vmatprep.subr.bf16.mxu0 0
    %631 = vmatpush1.bf16.msra.mxu0 %v461
    %632 = vmatprep.subr.bf16.mxu0 0
    %633 = vmatpush1.bf16.msra.mxu0 %v462
    %634 = vmatprep.subr.bf16.mxu0 0
    %635 = vmatpush1.bf16.msra.mxu0 %v463
    %636 = vmatprep.subr.bf16.mxu0 0
    %637 = vmatpush1.bf16.msra.mxu0 %v464
    %638 = vmatprep.subr.bf16.mxu0 0
    %639 = vmatpush1.bf16.msra.mxu0 %v465
    %640 = vmatprep.subr.bf16.mxu0 0
    %641 = vmatpush1.bf16.msra.mxu0 %v466
    %642 = vmatprep.subr.bf16.mxu0 0
    %643 = vmatpush1.bf16.msra.mxu0 %v467
    %644 = vmatprep.subr.bf16.mxu0 0
    %645 = vmatpush1.bf16.msra.mxu0 %v468
    %646 = vmatprep.subr.bf16.mxu0 0
    %647 = vmatpush1.bf16.msra.mxu0 %v469
    %648 = vmatprep.mubr.bf16.mxu0 %v211
    %649 = vmatmul.mubr.bf16.gmra.mrb[0].mxu0 %v210
    %v650 = vpop.f32.mrb[0].mxu0
    %v651 = vadd.f32 %v602, %v650
    %v652 = vpop.f32.mrb[0].mxu0
    %v653 = vpop.f32.mrb[0].mxu0
    %v654 = vadd.f32 %v605, %v653
    %v655 = vpop.f32.mrb[0].mxu0
    %656 = vmatprep.mubr.bf16.mxu0 %v217
    %657 = vmatmul.mubr.bf16.gmra.mrb[0].mxu0 %v216
    %v658 = vpop.f32.mrb[0].mxu0
    %v659 = vadd.f32 %v610, %v658
    %v660 = vpop.f32.mrb[0].mxu0
    %v661 = vpop.f32.mrb[0].mxu0
    %v662 = vadd.f32 %v613, %v661
    %v663 = vpop.f32.mrb[0].mxu0
    %664 = vdwg.mxu0
    %v665 = vmax.f32 %v651, 0.0
    %v666 = vmax.f32 %v654, 0.0
    %v667 = vmax.f32 %v659, 0.0
    %v668 = vmax.f32 %v662, 0.0
    %v669 = vld [vmem:[#allocation2] sm:$0x1]
    %v670 = vadd.f32 %v665, %v666
    %v671 = vrot.slane %v670, 4
    %v672 = vadd.f32 %v670, %v671
    %v673 = vrot.slane %v672, 2
    %v674 = vadd.f32 %v672, %v673
    %v675 = vrot.slane %v674, 1
    %v676 = vadd.f32 %v674, %v675
    %v677 = vadd.f32 %v669, %v676
    %678 = vst [vmem:[#allocation2] sm:$0x1] %v677
    %v679 = vld [vmem:[#allocation2 + $0x1] sm:$0x1]
    %v680 = vadd.f32 %v667, %v668
    %v681 = vrot.slane %v680, 4
    %v682 = vadd.f32 %v680, %v681
    %v683 = vrot.slane %v682, 2
    %v684 = vadd.f32 %v682, %v683
    %v685 = vrot.slane %v684, 1
    %v686 = vadd.f32 %v684, %v685
    %v687 = vadd.f32 %v679, %v686
    %688 = vst [vmem:[#allocation2 + $0x1] sm:$0x1] %v687
    // Predicated region
    $region34: #{tpu_custom_call.1} parent=1 // pred_check
      %p689 = pneg %p50
    $region35: #{tpu_custom_call.1} parent=1 // pred_check_branch
      %691 = sbr.rel (%p689) target = $region37
    $region36: #{tpu_custom_call.1} parent=1 // pred_region
      %v692 = vld [vmem:[#allocation2] sm:$0x3]
      %v693 = vld [vmem:[%s3] sm:$0x1]
      %v695 = vlaneseq
      %v696 = vshrl.u32 %v695, 7
      %v697 = vsub.s32 0, %v696
      %v698 = vrot.slane %v693, %v697
      %v700 = vmul.f32 %v692, %v698
      %vm701 = vcmask 1041408
      %v702 = vsel %vm701, %v700, 0.0
      %703 = vadd.xlane.f32.xlu0 %v702
      %v704 = vpop.xlane.xlu0 %703
      %v705 = vmul.f32 %v704, 0.0625
      %s706 = sld [smem:[#allocation3]]
      %v707 = vstv %s706
      %v708 = vadd.f32 %v705, %v707
      %v710 = vlaneseq
      %v711 = vshrl.u32 %v710, 7
      %v712 = vsub.s32 0, %v711
      %v713 = vrot.slane %v708, %v712
      %v714 = vlaneseq
      %v715 = vshrl.u32 %v714, 7
      %v716 = vsub.s32 1, %v715
      %v717 = vrot.slane %v708, %v716
      %vm720 = vcmask 0
      %721 = vst.msk [vmem:[%s5] sm:$0x1] %vm720, %v713
      %722 = vst.msk [vmem:[%s5 + $0x1] sm:$0x1] %vm720, %v717
    $region37: #{tpu_custom_call.1} parent=1 // pred_fallthru
      _
    // Predicated region
    $region38: #{tpu_custom_call.1} parent=1 // pred_check
      _
    $region39: #{tpu_custom_call.1} parent=1 // pred_check_branch
      %724 = sbr.rel (0) target = $region41
    $region40: #{tpu_custom_call.1} parent=1 // pred_region
      _
    $region41: #{tpu_custom_call.1} parent=1 // pred_fallthru
      _
    // Predicated region
    $region42: #{tpu_custom_call.1} parent=1 // pred_check
      _
    $region43: #{tpu_custom_call.1} parent=1 // pred_check_branch
      %726 = sbr.rel (0) target = $region45
    $region44: #{tpu_custom_call.1} parent=1 // pred_region
      _
    $region45: #{tpu_custom_call.1} parent=1 // pred_fallthru
      _
    %727 = vsyncpa [#allocation5], 1
    %728 = vsyncpa [#allocation7], 1

</llo_original>
